<compile_context>
chip_gen: v6e
topology: v6e:2x2x1
jax: 0.10.0
libtpu: 0.0.40
codegen_flags: <defaults>
</compile_context>

<pallas_src>
import functools

import jax
import jax.numpy as jnp
from jax.experimental import pallas as pl
from jax.experimental.pallas import tpu as pltpu


def _round_up(x, m):
    return ((x + m - 1) // m) * m


def _cdiv(a, b):
    return (a + b - 1) // b


def _pick_rows(n_rows, d, *, target_bytes=2 << 20, cap_rows=1 << 14):
    """Rows per tile: ~target_bytes per streamed block (lane-padded), mult of 8."""
    d_pad = max(_round_up(d, 128), 128)
    rows = max(8, (target_bytes // (d_pad * 4)) // 8 * 8)
    rows = min(rows, cap_rows, _round_up(n_rows, 8))
    return int(rows)


def _grid_split(total_steps, num_cores):
    cores = num_cores if total_steps >= num_cores else 1
    steps_per_core = _cdiv(total_steps, cores)
    return cores, steps_per_core


# ---------------------------------------------------------------------------
# Kernel 1: TransE score + BCE-with-logits, tiled over the triplet axis.
#   score = -||h + r - t||_2  (feature axis on TPU lanes)
#   bce   = y*||h+r-t|| + log1p(exp(-||h+r-t||))    (since score <= 0)
# `r` is gathered in-kernel from the VMEM-resident w_relation table via a
# one-hot matmul.  Per-core partial sums accumulate directly into the
# (8,128) output block (output-as-accumulator across the arbitrary axis).
# ---------------------------------------------------------------------------
def _bce_transe_kernel(wrel_ref, h_ref, t_ref, rid_ref, y_ref, o_ref, *,
                       blk, steps_per_core, num_valid, num_rels):
    c = pl.program_id(0)
    s = pl.program_id(1)

    @pl.when(s == 0)
    def _():
        o_ref[...] = jnp.zeros_like(o_ref)

    h = h_ref[...].astype(jnp.float32)          # (blk, D)
    t = t_ref[...].astype(jnp.float32)          # (blk, D)
    rid = rid_ref[...]                          # (blk, 1) int32
    y = y_ref[...].astype(jnp.float32)          # (blk, 1)

    # In-kernel relation gather: one-hot (blk, num_rels) @ (num_rels, D) on MXU.
    rel_iota = jax.lax.broadcasted_iota(jnp.int32, (blk, num_rels), 1)
    onehot = (rid == rel_iota).astype(jnp.float32)
    r = jnp.dot(onehot, wrel_ref[...].astype(jnp.float32),
                preferred_element_type=jnp.float32)          # (blk, D)

    diff = h + r - t
    sq = jnp.sum(diff * diff, axis=1, keepdims=True)         # (blk, 1)
    nrm = jnp.sqrt(sq)

    # BCE-with-logits at x = -nrm <= 0:
    #   max(x,0) - x*y + log1p(exp(-|x|)) = y*nrm + log1p(exp(-nrm))
    bce = y * nrm + jnp.log1p(jnp.exp(-nrm))

    # Mask padded / wasted-step rows BEFORE the reduce (overhang rows of the
    # last partial block contain undefined data).
    row = ((c * steps_per_core + s) * blk
           + jax.lax.broadcasted_iota(jnp.int32, (blk, 1), 0))
    bce = jnp.where(row < num_valid, bce, 0.0)

    partial = jnp.sum(bce, axis=0, keepdims=True)             # (1, 1)
    o_ref[...] += jnp.broadcast_to(partial, o_ref.shape)


def transe_bce_loss(h, t, rel_ids, labels, w_relation, *,
                    block_rows=None, num_cores=2):
    """mean(BCE_with_logits(-||h+r-t||_2, labels)); r gathered in-kernel."""
    T, D = h.shape
    num_rels = w_relation.shape[0]

    blk = block_rows if block_rows is not None else _pick_rows(T, D)
    blk = int(min(_round_up(blk, 8), _round_up(T, 8)))

    total_steps = _cdiv(T, blk)
    cores, steps_per_core = _grid_split(total_steps, num_cores)
    last_block = total_steps - 1

    rid = rel_ids.reshape(-1, 1).astype(jnp.int32)
    y = labels.reshape(-1, 1).astype(jnp.float32)

    def row_block(c, s):
        # Clamp wasted trailing steps of the parallel split onto the last
        # valid block; their rows are >= T and masked out in the kernel.
        return jnp.minimum(c * steps_per_core + s, last_block)

    row_spec = pl.BlockSpec((blk, D), lambda c, s: (row_block(c, s), 0))
    col_spec = pl.BlockSpec((blk, 1), lambda c, s: (row_block(c, s), 0))
    wrel_spec = pl.BlockSpec((num_rels, D), lambda c, s: (0, 0))
    out_spec = pl.BlockSpec((8, 128), lambda c, s: (c, 0))

    d_pad = max(_round_up(D, 128), 128)
    per_buf = (2 * blk * d_pad + 2 * blk * 128
               + _round_up(num_rels, 8) * d_pad + 8 * 128) * 4
    vmem_limit = int(min(max(3 * per_buf, 16 << 20), 48 << 20))

    kernel = functools.partial(
        _bce_transe_kernel, blk=blk, steps_per_core=steps_per_core,
        num_valid=int(T), num_rels=int(num_rels))

    out = pl.pallas_call(
        kernel,
        out_shape=jax.ShapeDtypeStruct((cores * 8, 128), jnp.float32),
        grid=(cores, steps_per_core),
        in_specs=[wrel_spec, row_spec, row_spec, col_spec, col_spec],
        out_specs=out_spec,
        compiler_params=pltpu.CompilerParams(
            dimension_semantics=("parallel", "arbitrary"),
            vmem_limit_bytes=vmem_limit),
    )(w_relation, h, t, rid, y)

    return jnp.sum(out[::8, 0]) / float(T)


# ---------------------------------------------------------------------------
# Kernel 2: tiled sum-of-squares reduction (for mean(embedding**2)).
# Same grid structure; overhang rows of the last partial block are masked.
# ---------------------------------------------------------------------------
def _sumsq_kernel(x_ref, o_ref, *, blk, steps_per_core, num_rows):
    c = pl.program_id(0)
    s = pl.program_id(1)

    @pl.when(s == 0)
    def _():
        o_ref[...] = jnp.zeros_like(o_ref)

    x = x_ref[...].astype(jnp.float32)
    row = ((c * steps_per_core + s) * blk
           + jax.lax.broadcasted_iota(jnp.int32, (blk, 1), 0))
    x = jnp.where(row < num_rows, x, 0.0)

    partial = jnp.sum(jnp.sum(x * x, axis=1, keepdims=True),
                      axis=0, keepdims=True)                  # (1, 1)
    o_ref[...] += jnp.broadcast_to(partial, o_ref.shape)


def mean_sq(x, *, block_rows=None, num_cores=2):
    """mean(x**2) over a 2-D array via a tiled Pallas reduction."""
    R, D = x.shape
    blk = block_rows if block_rows is not None else _pick_rows(R, D)
    blk = int(min(_round_up(blk, 8), _round_up(R, 8)))

    total_steps = _cdiv(R, blk)
    cores, steps_per_core = _grid_split(total_steps, num_cores)
    last_block = total_steps - 1

    def row_block(c, s):
        return jnp.minimum(c * steps_per_core + s, last_block)

    d_pad = max(_round_up(D, 128), 128)
    vmem_limit = int(min(max(3 * (blk * d_pad + 8 * 128) * 4, 16 << 20),
                         48 << 20))

    kernel = functools.partial(_sumsq_kernel, blk=blk,
                               steps_per_core=steps_per_core, num_rows=int(R))
    out = pl.pallas_call(
        kernel,
        out_shape=jax.ShapeDtypeStruct((cores * 8, 128), jnp.float32),
        grid=(cores, steps_per_core),
        in_specs=[pl.BlockSpec((blk, D), lambda c, s: (row_block(c, s), 0))],
        out_specs=pl.BlockSpec((8, 128), lambda c, s: (c, 0)),
        compiler_params=pltpu.CompilerParams(
            dimension_semantics=("parallel", "arbitrary"),
            vmem_limit_bytes=vmem_limit),
    )(x)
    return jnp.sum(out[::8, 0]) / float(R * D)


# ---------------------------------------------------------------------------
# LinkPredict.get_loss
# ---------------------------------------------------------------------------
def link_predict_get_loss(embedding, w_relation, triplets, labels, reg_param,
                          *, block_rows=None, num_cores=2):
    # Head/tail embedding gathers stay in XLA (glue).
    # TODO(synk): fuse these gathers into the pallas_call input pipeline
    # (allow_input_fusion / manual per-row DMA gather) once D >= ~128.
    h = embedding[triplets[:, 0]]
    t = embedding[triplets[:, 2]]
    rel_ids = triplets[:, 1]

    predict_loss = transe_bce_loss(h, t, rel_ids, labels, w_relation,
                                   block_rows=block_rows, num_cores=num_cores)
    reg_loss = (mean_sq(embedding, block_rows=block_rows, num_cores=num_cores)
                + jnp.mean(jnp.square(w_relation.astype(jnp.float32))))
    return predict_loss + float(reg_param) * reg_loss


# ---------------------------------------------------------------------------
# Parameter / input construction matching LinkPredict.__init__ shapes.
# ---------------------------------------------------------------------------
def make_params(key, num_nodes, h_dim, num_rels, word_num):
    k1, k2, k3 = jax.random.split(key, 3)
    # EmbeddingLayer.entityEmbedding : (num_nodes, h_dim)
    entity_emb = jax.random.normal(k1, (num_nodes, h_dim), jnp.float32) * 0.1
    # LinkPredict.w_relation : (num_rels, h_dim), kaiming-uniform-ish
    bound = (6.0 / h_dim) ** 0.5
    w_relation = jax.random.uniform(k2, (num_rels, h_dim), jnp.float32,
                                    -bound, bound)
    # DescEmbeddingLayer.wordEmbedding : (word_num + 1, h_dim), padding_idx=0
    word_emb = jax.random.normal(k3, (word_num + 1, h_dim), jnp.float32) * 0.1
    word_emb = word_emb.at[0].set(0.0)
    return entity_emb, w_relation, word_emb


def reference_loss(embedding, w_relation, triplets, labels, reg_param):
    h = embedding[triplets[:, 0]]
    r = w_relation[triplets[:, 1]]
    t = embedding[triplets[:, 2]]
    score = -jnp.linalg.norm(h + r - t, axis=1)
    x, y = score, labels.astype(jnp.float32)
    bce = jnp.maximum(x, 0.0) - x * y + jnp.log1p(jnp.exp(-jnp.abs(x)))
    predict_loss = jnp.mean(bce)
    reg = jnp.mean(embedding ** 2) + jnp.mean(w_relation ** 2)
    return predict_loss + reg_param * reg


if __name__ == "__main__":
    # Small deterministic shapes.  num_triplets is NOT a multiple of the tile
    # size and block_rows=8 forces multiple grid steps, so the partial-tile
    # mask, the accumulator path, and the 2-way parallel split (incl. a
    # clamped "wasted" step) are all exercised.
    num_nodes = 16
    h_dim = 32
    num_rels = 4
    word_num = 20
    num_triplets = 20
    desc_len = 12
    reg_param = 0.01
    block_rows = 8

    key = jax.random.PRNGKey(0)
    kp, kt, kr, kl, kn, kw = jax.random.split(key, 6)

    entity_emb, w_relation, word_emb = make_params(
        kp, num_nodes, h_dim, num_rels, word_num)

    # EmbeddingLayer.forward(g, h, r, norm) == entityEmbedding(h.squeeze())
    node_ids = jnp.arange(num_nodes, dtype=jnp.int32)
    embedding = entity_emb[node_ids]            # (num_nodes, h_dim)

    # DescEmbeddingLayer.forward: per-node word-id -> embedding lookup (glue).
    desc_word_ids = jax.random.randint(kw, (num_nodes, desc_len), 0,
                                       word_num + 1, dtype=jnp.int32)
    desc_embeddings = word_emb[desc_word_ids]   # (num_nodes, desc_len, h_dim)
    _ = desc_embeddings  # TODO(synk): Desc2VecCNN mixing not defined in source.

    # Triplets (head, rel, tail) and binary labels for get_loss.
    heads = jax.random.randint(kt, (num_triplets,), 0, num_nodes, jnp.int32)
    rels = jax.random.randint(kr, (num_triplets,), 0, num_rels, jnp.int32)
    tails = jax.random.randint(kn, (num_triplets,), 0, num_nodes, jnp.int32)
    triplets = jnp.stack([heads, rels, tails], axis=1)          # (T, 3)
    labels = jax.random.bernoulli(kl, 0.5, (num_triplets,)).astype(jnp.float32)

    loss = link_predict_get_loss(embedding, w_relation, triplets, labels,
                                 reg_param, block_rows=block_rows, num_cores=2)
    loss = jax.block_until_ready(loss)

    ref = reference_loss(embedding, w_relation, triplets, labels, reg_param)
    assert jnp.allclose(loss, ref, rtol=1e-5, atol=1e-5), (loss, ref)

    print("KERNEL_OK")
</pallas_src>

<mosaic_0001>
module attributes {stable_mosaic.version = 11 : i64} {
  func.func @_bce_transe_kernel(%arg0: i32, %arg1: i32, %arg2: memref<4x32xf32, #tpu.memory_space<vmem>>, %arg3: memref<8x32xf32, #tpu.memory_space<vmem>>, %arg4: memref<8x32xf32, #tpu.memory_space<vmem>>, %arg5: memref<8x1xi32, #tpu.memory_space<vmem>>, %arg6: memref<8x1xf32, #tpu.memory_space<vmem>>, %arg7: memref<8x128xf32, #tpu.memory_space<vmem>>) attributes {dimension_semantics = [#tpu.dimension_semantics<parallel>, #tpu.dimension_semantics<arbitrary>], iteration_bounds = array<i64: 2, 2>, scalar_prefetch = 0 : i64, scratch_operands = 0 : i64, tpu.core_type = #tpu.core_type<tc>, window_params = [{pipeline_mode = #tpu.pipeline_mode<synchronous>, transform_indices = @transform_0, window_bounds = array<i64: 4, 32>}, {transform_indices = @transform_1, window_bounds = array<i64: 8, 32>}, {transform_indices = @transform_2, window_bounds = array<i64: 8, 32>}, {transform_indices = @transform_3, window_bounds = array<i64: 8, 1>}, {transform_indices = @transform_4, window_bounds = array<i64: 8, 1>}, {transform_indices = @transform_5, window_bounds = array<i64: 8, 128>}]} {
    %c0_i32 = arith.constant 0 : i32
    %0 = arith.cmpi eq, %arg1, %c0_i32 : i32
    %1 = arith.extui %0 : i1 to i32
    %c0_i32_0 = arith.constant 0 : i32
    %2 = arith.cmpi ne, %1, %c0_i32_0 : i32
    scf.if %2 {
      %cst_18 = arith.constant 0.000000e+00 : f32
      %43 = vector.broadcast %cst_18 : f32 to vector<8x128xf32>
      %c0_19 = arith.constant 0 : index
      %c0_20 = arith.constant 0 : index
      %44 = vector.load %arg7[%c0_19, %c0_20] : memref<8x128xf32, #tpu.memory_space<vmem>>, vector<8x128xf32>
      tpu.vector_store %arg7[%c0_19, %c0_20], %43 {strides = array<i32>} : memref<8x128xf32, #tpu.memory_space<vmem>>, vector<8x128xf32>,
    } else {
    }
    %c0 = arith.constant 0 : index
    %c0_1 = arith.constant 0 : index
    %3 = vector.load %arg3[%c0, %c0_1] : memref<8x32xf32, #tpu.memory_space<vmem>>, vector<8x32xf32>
    %c0_2 = arith.constant 0 : index
    %c0_3 = arith.constant 0 : index
    %4 = vector.load %arg4[%c0_2, %c0_3] : memref<8x32xf32, #tpu.memory_space<vmem>>, vector<8x32xf32>
    %c0_4 = arith.constant 0 : index
    %c0_5 = arith.constant 0 : index
    %5 = vector.load %arg5[%c0_4, %c0_5] : memref<8x1xi32, #tpu.memory_space<vmem>>, vector<8x1xi32>
    %c0_6 = arith.constant 0 : index
    %c0_7 = arith.constant 0 : index
    %6 = vector.load %arg6[%c0_6, %c0_7] : memref<8x1xf32, #tpu.memory_space<vmem>>, vector<8x1xf32>
    %7 = tpu.iota {dimensions = array<i32: 1>} : vector<8x4xi32>
    %8 = vector.broadcast %5 : vector<8x1xi32> to vector<8x4xi32>
    %9 = arith.cmpi eq, %8, %7 : vector<8x4xi32>
    %10 = arith.extui %9 : vector<8x4xi1> to vector<8x4xi32>
    %11 = arith.sitofp %10 : vector<8x4xi32> to vector<8x4xf32>
    %c0_8 = arith.constant 0 : index
    %c0_9 = arith.constant 0 : index
    %12 = vector.load %arg2[%c0_8, %c0_9] : memref<4x32xf32, #tpu.memory_space<vmem>>, vector<4x32xf32>
    %cst = arith.constant dense<0.000000e+00> : vector<8x32xf32>
    %13 = tpu.matmul %11, %12, %cst {dimension_numbers = #tpu.dot_dimension_numbers<[1], [0], [0], [1], [0, 0, 1, 1], [], []>} : vector<8x4xf32>, vector<4x32xf32>, vector<8x32xf32> -> vector<8x32xf32>
    %14 = arith.addf %3, %13 : vector<8x32xf32>
    %15 = arith.subf %14, %4 : vector<8x32xf32>
    %16 = arith.mulf %15, %15 : vector<8x32xf32>
    %cst_10 = arith.constant dense<0.000000e+00> : vector<8xf32>
    %17 = vector.multi_reduction <add>, %16, %cst_10 [1] : vector<8x32xf32> to vector<8xf32>
    %18 = vector.shape_cast %17 : vector<8xf32> to vector<8x1xf32>
    %19 = math.sqrt %18 : vector<8x1xf32>
    %20 = arith.mulf %6, %19 : vector<8x1xf32>
    %cst_11 = arith.constant 0.000000e+00 : f32
    %21 = vector.broadcast %cst_11 : f32 to vector<8x1xf32>
    %22 = arith.subf %21, %19 : vector<8x1xf32>
    %23 = math.exp %22 : vector<8x1xf32>
    %24 = math.log1p %23 : vector<8x1xf32>
    %25 = arith.addf %20, %24 : vector<8x1xf32>
    %c2_i32 = arith.constant 2 : i32
    %26 = arith.muli %arg0, %c2_i32 : i32
    %27 = arith.addi %26, %arg1 : i32
    %c8_i32 = arith.constant 8 : i32
    %28 = arith.muli %27, %c8_i32 : i32
    %29 = tpu.iota {dimensions = array<i32: 0>} : vector<8x1xi32>
    %30 = vector.broadcast %28 : i32 to vector<8x1xi32>
    %31 = arith.addi %30, %29 : vector<8x1xi32>
    %c20_i32 = arith.constant 20 : i32
    %32 = vector.broadcast %c20_i32 : i32 to vector<8x1xi32>
    %33 = arith.cmpi slt, %31, %32 : vector<8x1xi32>
    %cst_12 = arith.constant 0.000000e+00 : f32
    %34 = vector.broadcast %cst_12 : f32 to vector<8x1xf32>
    %35 = arith.select %33, %25, %34 : vector<8x1xi1>, vector<8x1xf32>
    %cst_13 = arith.constant dense<0.000000e+00> : vector<1xf32>
    %36 = vector.multi_reduction <add>, %35, %cst_13 [0] : vector<8x1xf32> to vector<1xf32>
    %37 = vector.shape_cast %36 : vector<1xf32> to vector<1x1xf32>
    %c0_14 = arith.constant 0 : index
    %c0_15 = arith.constant 0 : index
    %38 = vector.load %arg7[%c0_14, %c0_15] : memref<8x128xf32, #tpu.memory_space<vmem>>, vector<8x128xf32>
    %39 = vector.shape_cast %37 : vector<1x1xf32> to vector<1x1xf32>
    %40 = vector.broadcast %39 : vector<1x1xf32> to vector<8x128xf32>
    %41 = arith.addf %38, %40 : vector<8x128xf32>
    %c0_16 = arith.constant 0 : index
    %c0_17 = arith.constant 0 : index
    %42 = vector.load %arg7[%c0_16, %c0_17] : memref<8x128xf32, #tpu.memory_space<vmem>>, vector<8x128xf32>
    tpu.vector_store %arg7[%c0_16, %c0_17], %41 {strides = array<i32>} : memref<8x128xf32, #tpu.memory_space<vmem>>, vector<8x128xf32>,
    return
  }
  func.func @transform_0(%arg0: i32, %arg1: i32) -> (i32, i32) {
    %c0_i32 = arith.constant 0 : i32
    %c0_i32_0 = arith.constant 0 : i32
    %c0_i32_1 = arith.constant 0 : i32
    return %c0_i32, %c0_i32_0 : i32, i32
  }
  func.func @transform_1(%arg0: i32, %arg1: i32) -> (i32, i32) {
    %c2_i32 = arith.constant 2 : i32
    %0 = arith.muli %arg0, %c2_i32 : i32
    %1 = arith.addi %0, %arg1 : i32
    %c2_i32_0 = arith.constant 2 : i32
    %2 = arith.minsi %1, %c2_i32_0 : i32
    %c0_i32 = arith.constant 0 : i32
    %c0_i32_1 = arith.constant 0 : i32
    return %2, %c0_i32 : i32, i32
  }
  func.func @transform_2(%arg0: i32, %arg1: i32) -> (i32, i32) {
    %c2_i32 = arith.constant 2 : i32
    %0 = arith.muli %arg0, %c2_i32 : i32
    %1 = arith.addi %0, %arg1 : i32
    %c2_i32_0 = arith.constant 2 : i32
    %2 = arith.minsi %1, %c2_i32_0 : i32
    %c0_i32 = arith.constant 0 : i32
    %c0_i32_1 = arith.constant 0 : i32
    return %2, %c0_i32 : i32, i32
  }
  func.func @transform_3(%arg0: i32, %arg1: i32) -> (i32, i32) {
    %c2_i32 = arith.constant 2 : i32
    %0 = arith.muli %arg0, %c2_i32 : i32
    %1 = arith.addi %0, %arg1 : i32
    %c2_i32_0 = arith.constant 2 : i32
    %2 = arith.minsi %1, %c2_i32_0 : i32
    %c0_i32 = arith.constant 0 : i32
    %c0_i32_1 = arith.constant 0 : i32
    return %2, %c0_i32 : i32, i32
  }
  func.func @transform_4(%arg0: i32, %arg1: i32) -> (i32, i32) {
    %c2_i32 = arith.constant 2 : i32
    %0 = arith.muli %arg0, %c2_i32 : i32
    %1 = arith.addi %0, %arg1 : i32
    %c2_i32_0 = arith.constant 2 : i32
    %2 = arith.minsi %1, %c2_i32_0 : i32
    %c0_i32 = arith.constant 0 : i32
    %c0_i32_1 = arith.constant 0 : i32
    return %2, %c0_i32 : i32, i32
  }
  func.func @transform_5(%arg0: i32, %arg1: i32) -> (i32, i32) {
    %c0_i32 = arith.constant 0 : i32
    %c0_i32_0 = arith.constant 0 : i32
    return %arg0, %c0_i32 : i32, i32
  }
}

</mosaic_0001>

<llo_original>
// kernel: tpu_custom_call.1
$region0: #{tpu_custom_call.1}
  #allocation0 [shape = 'u32[]', space=smem, size = 0x4, offset = 0x4, fixed_abs, tag = 'smem constant byte address 0x4 - core index']
  #allocation1 [shape = 'u32[144,128]{1,0:T(1,128)}', space=vmem, size = 0x12000, scoped, tag = 'internal scratch']
  %s0 = inlined_call_operand.hbm [shape: f32[4,32], index: 0, kind: input, shape index: {}]
  %s1 = inlined_call_operand.vmem [shape: f32[20,32], index: 1, kind: input, shape index: {}]
  %s2 = inlined_call_operand.vmem [shape: f32[20,32], index: 2, kind: input, shape index: {}]
  %s3 = inlined_call_operand.vmem [shape: s32[20,1], index: 3, kind: input, shape index: {}]
  %s4 = inlined_call_operand.vmem [shape: f32[20,1], index: 4, kind: input, shape index: {}]
  %s5 = inlined_call_operand.hbm [shape: f32[16,128], index: 5, kind: output, shape index: {}]
  %s6 = sld [smem:[#allocation0]]
  $region61: #{tpu_custom_call.1} parent=0
    _
  %s8 = ssub.s32 1, %s6
  %s9 = scalar_select 0, %s8, %s6
  $region1: #{tpu_custom_call.1} parent=0
    #allocation2 [shape = 'u8[2048]{0}', space=vmem, size = 0x800, scoped, tag = 'input window, operand 0, single buffered']
    #allocation3 [shape = 's32[2]{0}', space=sflag, size = 0x8, scoped, tag = 'scoped memory for tpu_custom_call.1']
    #allocation4 [shape = 's32[2]{0}', space=sflag, size = 0x8, scoped, tag = 'scoped memory for tpu_custom_call.1']
    #allocation5 [shape = 'u8[8192]{0}', space=vmem, size = 0x2000, scoped, tag = 'output window, operand 0']
    %10 = vsyncpa [#allocation3], 0
    %11 = vsyncpa [#allocation4], 0
    %s12 = scalar_lea.sflag [#allocation4], 1
    %13 = vsyncpa %s12, 0
    loop: start=0, step=1, limit=6
    $region2: #{tpu_custom_call.1} parent=1 // loop_pre_header
      _
    $region3: #{tpu_custom_call.1} parent=1 // loop_header
      %s15 = sphi 0, %s19
      %p16 = scmp.ge.s32.totalorder %s15, 6
      %s22 = sphi 0, %s34
      %s23 = sphi 0, %s30
      %s24 = sphi 0, %s22
      %s25 = sphi 0, %s23
      %s26 = sphi 0, %s24
      %s27 = sphi 0, %s25
      %s35 = sphi 0, %s35
      %s37 = sphi 0, %s35
      %s38 = sphi 0, %s37
      %s52 = sphi 0, %s38
      %s66 = sphi 0, %s68
      %s69 = sphi 0, %s66
      %s70 = sphi 0, %s69
      %s86 = sphi 0, %s70
      %s100 = sphi 0, %s102
      %s103 = sphi 0, %s100
      %s104 = sphi 0, %s103
      %s120 = sphi 0, %s104
      %s134 = sphi 0, %s136
      %s137 = sphi 0, %s134
      %s138 = sphi 0, %s137
      %s154 = sphi 0, %s138
      %s168 = sphi 0, %s170
      %s171 = sphi 0, %s168
      %s172 = sphi 0, %s171
      %s188 = sphi 0, %s172
      %s194 = sphi 0, %s196
      %s197 = sphi 0, %s194
      %s198 = sphi 0, %s197
      %s214 = sphi 0, %s198
    $region4: #{tpu_custom_call.1} parent=1 // loop_header_branch
      %18 = sbr.rel (%p16) target = $region8
    $region5: #{tpu_custom_call.1} parent=1 // loop_body
      %s20 = ssub.s32 %s15, 1
      %s21 = ssub.s32 %s15, 2
      %s28 = sadd.s32 1, %s23
      %p29 = scmp.ge.s32.totalorder %s28, 2
      %s30 = scalar_select %p29, 0, %s28
      %s31 = sadd.s32 1, %s22
      %s32 = scalar_select %p29, %s31, %s22
      %p33 = scmp.ge.s32.totalorder %s32, 2
      %s34 = scalar_select %p33, 0, %s32
      %s36 = sadd.s32 %s35, 1
      %p39 = scmp.eq.s32.totalorder %s15, 3
      %p40 = scmp.ne.s32.totalorder %s35, %s37
      %p41 = scmp.eq.s32.totalorder %s15, 0
      %p42 = por %p40, %p41
      %p43 = scmp.ne.s32.totalorder %s35, %s37
      %p44 = scmp.eq.s32.totalorder %s20, 3
      %p45 = por %p43, %p44
      %p46 = scmp.ne.s32.totalorder %s37, %s38
      %p47 = scmp.eq.s32.totalorder %s20, 0
      %p48 = por %p46, %p47
      %p49 = scmp.ne.s32.totalorder %s37, %s38
      %p50 = scmp.eq.s32.totalorder %s21, 3
      %p51 = por %p49, %p50
      %p53 = scmp.ne.s32.totalorder %s38, %s52
      %p54 = scmp.eq.s32.totalorder %s21, 0
      %p55 = por %p53, %p54
      %s56 = smul.u32 %s22, 2
      %s57 = sadd.s32 %s56, %s23
      %p58 = scmp.lt.s32.totalorder %s57, 2
      %s59 = scalar_select %p58, %s57, 2
      %s60 = smul.u32 %s34, 2
      %s61 = sadd.s32 %s60, %s30
      %p62 = scmp.lt.s32.totalorder %s61, 2
      %s63 = scalar_select %p62, %s61, 2
      %s64 = ssub.s32 %s59, %s63
      %p65 = scmp.eq.s32.totalorder %s64, 0
      %s67 = sadd.s32 %s66, 1
      %s68 = scalar_select %p65, %s66, %s67
      %p71 = pneg %p65
      %p72 = scmp.eq.s32.totalorder %s15, 3
      %p73 = por %p71, %p72
      %p74 = scmp.ne.s32.totalorder %s66, %s69
      %p75 = scmp.eq.s32.totalorder %s15, 0
      %p76 = por %p74, %p75
      %p77 = scmp.ne.s32.totalorder %s66, %s69
      %p78 = scmp.eq.s32.totalorder %s20, 3
      %p79 = por %p77, %p78
      %p80 = scmp.ne.s32.totalorder %s69, %s70
      %p81 = scmp.eq.s32.totalorder %s20, 0
      %p82 = por %p80, %p81
      %p83 = scmp.ne.s32.totalorder %s69, %s70
      %p84 = scmp.eq.s32.totalorder %s21, 3
      %p85 = por %p83, %p84
      %p87 = scmp.ne.s32.totalorder %s70, %s86
      %p88 = scmp.eq.s32.totalorder %s21, 0
      %p89 = por %p87, %p88
      %s90 = smul.u32 %s22, 2
      %s91 = sadd.s32 %s90, %s23
      %p92 = scmp.lt.s32.totalorder %s91, 2
      %s93 = scalar_select %p92, %s91, 2
      %s94 = smul.u32 %s34, 2
      %s95 = sadd.s32 %s94, %s30
      %p96 = scmp.lt.s32.totalorder %s95, 2
      %s97 = scalar_select %p96, %s95, 2
      %s98 = ssub.s32 %s93, %s97
      %p99 = scmp.eq.s32.totalorder %s98, 0
      %s101 = sadd.s32 %s100, 1
      %s102 = scalar_select %p99, %s100, %s101
      %p105 = pneg %p99
      %p106 = scmp.eq.s32.totalorder %s15, 3
      %p107 = por %p105, %p106
      %p108 = scmp.ne.s32.totalorder %s100, %s103
      %p109 = scmp.eq.s32.totalorder %s15, 0
      %p110 = por %p108, %p109
      %p111 = scmp.ne.s32.totalorder %s100, %s103
      %p112 = scmp.eq.s32.totalorder %s20, 3
      %p113 = por %p111, %p112
      %p114 = scmp.ne.s32.totalorder %s103, %s104
      %p115 = scmp.eq.s32.totalorder %s20, 0
      %p116 = por %p114, %p115
      %p117 = scmp.ne.s32.totalorder %s103, %s104
      %p118 = scmp.eq.s32.totalorder %s21, 3
      %p119 = por %p117, %p118
      %p121 = scmp.ne.s32.totalorder %s104, %s120
      %p122 = scmp.eq.s32.totalorder %s21, 0
      %p123 = por %p121, %p122
      %s124 = smul.u32 %s22, 2
      %s125 = sadd.s32 %s124, %s23
      %p126 = scmp.lt.s32.totalorder %s125, 2
      %s127 = scalar_select %p126, %s125, 2
      %s128 = smul.u32 %s34, 2
      %s129 = sadd.s32 %s128, %s30
      %p130 = scmp.lt.s32.totalorder %s129, 2
      %s131 = scalar_select %p130, %s129, 2
      %s132 = ssub.s32 %s127, %s131
      %p133 = scmp.eq.s32.totalorder %s132, 0
      %s135 = sadd.s32 %s134, 1
      %s136 = scalar_select %p133, %s134, %s135
      %p139 = pneg %p133
      %p140 = scmp.eq.s32.totalorder %s15, 3
      %p141 = por %p139, %p140
      %p142 = scmp.ne.s32.totalorder %s134, %s137
      %p143 = scmp.eq.s32.totalorder %s15, 0
      %p144 = por %p142, %p143
      %p145 = scmp.ne.s32.totalorder %s134, %s137
      %p146 = scmp.eq.s32.totalorder %s20, 3
      %p147 = por %p145, %p146
      %p148 = scmp.ne.s32.totalorder %s137, %s138
      %p149 = scmp.eq.s32.totalorder %s20, 0
      %p150 = por %p148, %p149
      %p151 = scmp.ne.s32.totalorder %s137, %s138
      %p152 = scmp.eq.s32.totalorder %s21, 3
      %p153 = por %p151, %p152
      %p155 = scmp.ne.s32.totalorder %s138, %s154
      %p156 = scmp.eq.s32.totalorder %s21, 0
      %p157 = por %p155, %p156
      %s158 = smul.u32 %s22, 2
      %s159 = sadd.s32 %s158, %s23
      %p160 = scmp.lt.s32.totalorder %s159, 2
      %s161 = scalar_select %p160, %s159, 2
      %s162 = smul.u32 %s34, 2
      %s163 = sadd.s32 %s162, %s30
      %p164 = scmp.lt.s32.totalorder %s163, 2
      %s165 = scalar_select %p164, %s163, 2
      %s166 = ssub.s32 %s161, %s165
      %p167 = scmp.eq.s32.totalorder %s166, 0
      %s169 = sadd.s32 %s168, 1
      %s170 = scalar_select %p167, %s168, %s169
      %p173 = pneg %p167
      %p174 = scmp.eq.s32.totalorder %s15, 3
      %p175 = por %p173, %p174
      %p176 = scmp.ne.s32.totalorder %s168, %s171
      %p177 = scmp.eq.s32.totalorder %s15, 0
      %p178 = por %p176, %p177
      %p179 = scmp.ne.s32.totalorder %s168, %s171
      %p180 = scmp.eq.s32.totalorder %s20, 3
      %p181 = por %p179, %p180
      %p182 = scmp.ne.s32.totalorder %s171, %s172
      %p183 = scmp.eq.s32.totalorder %s20, 0
      %p184 = por %p182, %p183
      %p185 = scmp.ne.s32.totalorder %s171, %s172
      %p186 = scmp.eq.s32.totalorder %s21, 3
      %p187 = por %p185, %p186
      %p189 = scmp.ne.s32.totalorder %s172, %s188
      %p190 = scmp.eq.s32.totalorder %s21, 0
      %p191 = por %p189, %p190
      %s192 = ssub.s32 %s22, %s34
      %p193 = scmp.eq.s32.totalorder %s192, 0
      %s195 = sadd.s32 %s194, 1
      %s196 = scalar_select %p193, %s194, %s195
      %p199 = pneg %p193
      %p200 = scmp.eq.s32.totalorder %s15, 3
      %p201 = por %p199, %p200
      %p202 = scmp.ne.s32.totalorder %s194, %s197
      %p203 = scmp.eq.s32.totalorder %s15, 0
      %p204 = por %p202, %p203
      %p205 = scmp.ne.s32.totalorder %s194, %s197
      %p206 = scmp.eq.s32.totalorder %s20, 3
      %p207 = por %p205, %p206
      %p208 = scmp.ne.s32.totalorder %s197, %s198
      %p209 = scmp.eq.s32.totalorder %s20, 0
      %p210 = por %p208, %p209
      %p211 = scmp.ne.s32.totalorder %s197, %s198
      %p212 = scmp.eq.s32.totalorder %s21, 3
      %p213 = por %p211, %p212
      %p215 = scmp.ne.s32.totalorder %s198, %s214
      %p216 = scmp.eq.s32.totalorder %s21, 0
      %p217 = por %p215, %p216
      %p218 = scmp.le.s32.totalorder 1, %s15
      %p219 = scmp.lt.s32.totalorder %s15, 5
      %p220 = pnand %p218, %p219
      %p221 = pneg %p220
      // Predicated region
      $region9: #{tpu_custom_call.1} parent=5 // pred_check
        _
      $region10: #{tpu_custom_call.1} parent=5 // pred_check_branch
        %223 = sbr.rel (%p220) target = $region12
      $region11: #{tpu_custom_call.1} parent=5 // pred_region
        %s224 = ssub.s32 %s15, 1
        // Predicated region
        $region13: #{tpu_custom_call.1} parent=11 // pred_check
          %p225 = pneg %p48
        $region14: #{tpu_custom_call.1} parent=11 // pred_check_branch
          %227 = sbr.rel (%p225) target = $region16
        $region15: #{tpu_custom_call.1} parent=11 // pred_region
          %s229 = ssub.s32 64, 64
          %230 = vsyncadd [#allocation3], %s229
          %s232 = sshll.u32 [#allocation2], 4
          %s233 = int_to_ptr.vmem [resolvable:$true] %s232
          %235 = dma.hbm_to_vmem [thread:$0]  %s0, 64, %s233, [#allocation3]
        $region16: #{tpu_custom_call.1} parent=11 // pred_fallthru
          _
      $region12: #{tpu_custom_call.1} parent=5 // pred_fallthru
        _
      %p236 = scmp.lt.s32.totalorder %s15, 4
      // Predicated region
      $region17: #{tpu_custom_call.1} parent=5 // pred_check
        %p237 = pneg %p236
      $region18: #{tpu_custom_call.1} parent=5 // pred_check_branch
        %239 = sbr.rel (%p237) target = $region20
      $region19: #{tpu_custom_call.1} parent=5 // pred_region
        // Predicated region
        $region21: #{tpu_custom_call.1} parent=19 // pred_check
          %p240 = pneg %p76
        $region22: #{tpu_custom_call.1} parent=19 // pred_check_branch
          %242 = sbr.rel (%p240) target = $region24
        $region23: #{tpu_custom_call.1} parent=19 // pred_region
          %s243 = smul.u32 %s22, 2
          %s244 = sadd.s32 %s243, %s23
          %p245 = scmp.lt.s32.totalorder %s244, 2
          %s246 = scalar_select %p245, %s244, 2
          %p247 = scmp.lt.s32.totalorder %s246, 2
          %s248 = scalar_select %p247, %s246, 2
          %s249 = smul.addr %s248, 8
          %s250 = scalar_lea.vmem %s1, %s249
          %s251 = smul.u32 %s22, 2
          %s252 = sadd.s32 %s251, %s23
          %p253 = scmp.lt.s32.totalorder %s252, 2
          %s254 = scalar_select %p253, %s252, 2
        $region24: #{tpu_custom_call.1} parent=19 // pred_fallthru
          _
        // Predicated region
        $region25: #{tpu_custom_call.1} parent=19 // pred_check
          %p255 = pneg %p110
        $region26: #{tpu_custom_call.1} parent=19 // pred_check_branch
          %257 = sbr.rel (%p255) target = $region28
        $region27: #{tpu_custom_call.1} parent=19 // pred_region
          %s258 = smul.u32 %s22, 2
          %s259 = sadd.s32 %s258, %s23
          %p260 = scmp.lt.s32.totalorder %s259, 2
          %s261 = scalar_select %p260, %s259, 2
          %p262 = scmp.lt.s32.totalorder %s261, 2
          %s263 = scalar_select %p262, %s261, 2
          %s264 = smul.addr %s263, 8
          %s265 = scalar_lea.vmem %s2, %s264
          %s266 = smul.u32 %s22, 2
          %s267 = sadd.s32 %s266, %s23
          %p268 = scmp.lt.s32.totalorder %s267, 2
          %s269 = scalar_select %p268, %s267, 2
        $region28: #{tpu_custom_call.1} parent=19 // pred_fallthru
          _
        // Predicated region
        $region29: #{tpu_custom_call.1} parent=19 // pred_check
          %p270 = pneg %p144
        $region30: #{tpu_custom_call.1} parent=19 // pred_check_branch
          %272 = sbr.rel (%p270) target = $region32
        $region31: #{tpu_custom_call.1} parent=19 // pred_region
          %s273 = smul.u32 %s22, 2
          %s274 = sadd.s32 %s273, %s23
          %p275 = scmp.lt.s32.totalorder %s274, 2
          %s276 = scalar_select %p275, %s274, 2
          %p277 = scmp.lt.s32.totalorder %s276, 2
          %s278 = scalar_select %p277, %s276, 2
          %s279 = smul.addr %s278, 8
          %s280 = scalar_lea.vmem %s3, %s279
          %s281 = smul.u32 %s22, 2
          %s282 = sadd.s32 %s281, %s23
          %p283 = scmp.lt.s32.totalorder %s282, 2
          %s284 = scalar_select %p283, %s282, 2
        $region32: #{tpu_custom_call.1} parent=19 // pred_fallthru
          _
        // Predicated region
        $region33: #{tpu_custom_call.1} parent=19 // pred_check
          %p285 = pneg %p178
        $region34: #{tpu_custom_call.1} parent=19 // pred_check_branch
          %287 = sbr.rel (%p285) target = $region36
        $region35: #{tpu_custom_call.1} parent=19 // pred_region
          %s288 = smul.u32 %s22, 2
          %s289 = sadd.s32 %s288, %s23
          %p290 = scmp.lt.s32.totalorder %s289, 2
          %s291 = scalar_select %p290, %s289, 2
          %p292 = scmp.lt.s32.totalorder %s291, 2
          %s293 = scalar_select %p292, %s291, 2
          %s294 = smul.addr %s293, 8
          %s295 = scalar_lea.vmem %s4, %s294
          %s296 = smul.u32 %s22, 2
          %s297 = sadd.s32 %s296, %s23
          %p298 = scmp.lt.s32.totalorder %s297, 2
          %s299 = scalar_select %p298, %s297, 2
        $region36: #{tpu_custom_call.1} parent=19 // pred_fallthru
          _
      $region20: #{tpu_custom_call.1} parent=5 // pred_fallthru
        _
      %p300 = scmp.le.s32.totalorder 1, %s15
      %p301 = scmp.lt.s32.totalorder %s15, 5
      %p302 = pnand %p300, %p301
      %p303 = pneg %p302
      // Predicated region
      $region37: #{tpu_custom_call.1} parent=5 // pred_check
        _
      $region38: #{tpu_custom_call.1} parent=5 // pred_check_branch
        %305 = sbr.rel (%p302) target = $region40
      $region39: #{tpu_custom_call.1} parent=5 // pred_region
        %s306 = ssub.s32 %s15, 1
        // Predicated region
        $region41: #{tpu_custom_call.1} parent=39 // pred_check
          %p307 = pneg %p48
        $region42: #{tpu_custom_call.1} parent=39 // pred_check_branch
          %309 = sbr.rel (%p307) target = $region44
        $region43: #{tpu_custom_call.1} parent=39 // pred_region
          %310 = dma.done [#allocation3], 64
        $region44: #{tpu_custom_call.1} parent=39 // pred_fallthru
          _
        %p311 = pneg %p48
        %p312 = pneg %p45
        %s313 = smul.u32 %s24, 2
        %s314 = sadd.s32 %s313, %s25
        %p315 = scmp.lt.s32.totalorder %s314, 2
        %s316 = scalar_select %p315, %s314, 2
        %p317 = scmp.lt.s32.totalorder %s316, 2
        %s318 = scalar_select %p317, %s316, 2
        %s319 = smul.addr %s318, 8
        %s320 = scalar_lea.vmem %s1, %s319
        %p321 = pneg %p82
        %p322 = pneg %p79
        %s323 = smul.u32 %s24, 2
        %s324 = sadd.s32 %s323, %s25
        %p325 = scmp.lt.s32.totalorder %s324, 2
        %s326 = scalar_select %p325, %s324, 2
        %p327 = scmp.lt.s32.totalorder %s326, 2
        %s328 = scalar_select %p327, %s326, 2
        %s329 = smul.addr %s328, 8
        %s330 = scalar_lea.vmem %s2, %s329
        %p331 = pneg %p116
        %p332 = pneg %p113
        %s333 = smul.u32 %s24, 2
        %s334 = sadd.s32 %s333, %s25
        %p335 = scmp.lt.s32.totalorder %s334, 2
        %s336 = scalar_select %p335, %s334, 2
        %p337 = scmp.lt.s32.totalorder %s336, 2
        %s338 = scalar_select %p337, %s336, 2
        %s339 = smul.addr %s338, 8
        %s340 = scalar_lea.vmem %s3, %s339
        %p341 = pneg %p150
        %p342 = pneg %p147
        %s343 = smul.u32 %s24, 2
        %s344 = sadd.s32 %s343, %s25
        %p345 = scmp.lt.s32.totalorder %s344, 2
        %s346 = scalar_select %p345, %s344, 2
        %p347 = scmp.lt.s32.totalorder %s346, 2
        %s348 = scalar_select %p347, %s346, 2
        %s349 = smul.addr %s348, 8
        %s350 = scalar_lea.vmem %s4, %s349
        %p351 = pneg %p184
        %p352 = pneg %p181
        %p353 = pneg %p210
        %p354 = pneg %p207
        %s355 = sand.u32 %s197, 1
        %s356 = scalar_lea.sflag [#allocation4], %s355
        %s357 = sand.u32 %s197, 1
        %s358 = smul.addr %s357, 8
        %s359 = scalar_lea.vmem [#allocation5], %s358
        %s360 = smul.u32 %s24, 2
        %s361 = sadd.s32 %s360, %s25
        %p362 = scmp.lt.s32.totalorder %s361, 2
        %s363 = scalar_select %p362, %s361, 2
        %p364 = scmp.lt.s32.totalorder %s363, 2
        %s365 = scalar_select %p364, %s363, 2
        %s366 = smul.addr %s365, 8
        %s367 = scalar_lea.vmem %s1, %s366
        %s368 = smul.u32 %s24, 2
        %s369 = sadd.s32 %s368, %s25
        %p370 = scmp.lt.s32.totalorder %s369, 2
        %s371 = scalar_select %p370, %s369, 2
        %s372 = smul.u32 %s24, 2
        %s373 = sadd.s32 %s372, %s25
        %p374 = scmp.lt.s32.totalorder %s373, 2
        %s375 = scalar_select %p374, %s373, 2
        %p376 = scmp.lt.s32.totalorder %s375, 2
        %s377 = scalar_select %p376, %s375, 2
        %s378 = smul.addr %s377, 8
        %s379 = scalar_lea.vmem %s2, %s378
        %s380 = smul.u32 %s24, 2
        %s381 = sadd.s32 %s380, %s25
        %p382 = scmp.lt.s32.totalorder %s381, 2
        %s383 = scalar_select %p382, %s381, 2
        %s384 = smul.u32 %s24, 2
        %s385 = sadd.s32 %s384, %s25
        %p386 = scmp.lt.s32.totalorder %s385, 2
        %s387 = scalar_select %p386, %s385, 2
        %p388 = scmp.lt.s32.totalorder %s387, 2
        %s389 = scalar_select %p388, %s387, 2
        %s390 = smul.addr %s389, 8
        %s391 = scalar_lea.vmem %s3, %s390
        %s392 = smul.u32 %s24, 2
        %s393 = sadd.s32 %s392, %s25
        %p394 = scmp.lt.s32.totalorder %s393, 2
        %s395 = scalar_select %p394, %s393, 2
        %s396 = smul.u32 %s24, 2
        %s397 = sadd.s32 %s396, %s25
        %p398 = scmp.lt.s32.totalorder %s397, 2
        %s399 = scalar_select %p398, %s397, 2
        %p400 = scmp.lt.s32.totalorder %s399, 2
        %s401 = scalar_select %p400, %s399, 2
        %s402 = smul.addr %s401, 8
        %s403 = scalar_lea.vmem %s4, %s402
        %s404 = smul.u32 %s24, 2
        %s405 = sadd.s32 %s404, %s25
        %p406 = scmp.lt.s32.totalorder %s405, 2
        %s407 = scalar_select %p406, %s405, 2
        %p408 = scmp.eq.s32.totalorder %s25, 0
        // Predicated region
        $region45: #{tpu_custom_call.1} parent=39 // pred_check
          %p409 = pneg %p408
        $region46: #{tpu_custom_call.1} parent=39 // pred_check_branch
          %411 = sbr.rel (%p409) target = $region48
        $region47: #{tpu_custom_call.1} parent=39 // pred_region
          %412 = vst [vmem:[%s359] sm:$0xff] 0.0
        $region48: #{tpu_custom_call.1} parent=39 // pred_fallthru
          _
        %v413 = vld [vmem:[%s367] sm:$0xff]
        %v414 = vld [vmem:[%s379] sm:$0xff]
        %v415 = vld [vmem:[%s391] sm:$0xff]
        %v416 = vld [vmem:[%s403] sm:$0xff]
        %v417 = vlaneseq
        %v418 = vand.u32 %v417, 127
        %419 = vset.pattern.permute.xlu0 0
        %420 = vperm.xlu0 %419, %v415
        %v421 = vpop.permute.xlu0 %420
        %vm422 = vcmp.eq.s32.totalorder %v421, %v418
        %v423 = vsel %vm422, 1, 0
        %v424 = vcvt.s32.f32 %v423
        %v425 = vld [vmem:[#allocation2] sm:$0xf]
        %vm426 = vcmask 31744
        %v428 = vsel %vm426, %v424, 0
        %vm430 = vcmask 1043456
        %v432 = vsel %vm430, %v425, 0
        %434 = vmatprep.subr.mxu0 0.0
        %435 = vmatpush1.msra.mxu0 0.0
        %436 = vmatprep.subr.mxu0 0.0
        %437 = vmatpush1.msra.mxu0 0.0
        %438 = vmatprep.subr.mxu0 0.0
        %439 = vmatpush1.msra.mxu0 0.0
        %440 = vmatprep.subr.mxu0 0.0
        %441 = vmatpush1.msra.mxu0 0.0
        %442 = vmatprep.subr.mxu0 0.0
        %443 = vmatpush1.msra.mxu0 0.0
        %444 = vmatprep.subr.mxu0 0.0
        %445 = vmatpush1.msra.mxu0 0.0
        %446 = vmatprep.subr.mxu0 0.0
        %447 = vmatpush1.msra.mxu0 0.0
        %448 = vmatprep.subr.mxu0 0.0
        %449 = vmatpush1.msra.mxu0 0.0
        %450 = vmatprep.subr.mxu0 0.0
        %451 = vmatpush1.msra.mxu0 0.0
        %452 = vmatprep.subr.mxu0 0.0
        %453 = vmatpush1.msra.mxu0 0.0
        %454 = vmatprep.subr.mxu0 0.0
        %455 = vmatpush1.msra.mxu0 0.0
        %456 = vmatprep.subr.mxu0 0.0
        %457 = vmatpush1.msra.mxu0 0.0
        %458 = vmatprep.subr.mxu0 0.0
        %459 = vmatpush1.msra.mxu0 0.0
        %460 = vmatprep.subr.mxu0 0.0
        %461 = vmatpush1.msra.mxu0 0.0
        %462 = vmatprep.subr.mxu0 0.0
        %463 = vmatpush1.msra.mxu0 0.0
        %464 = vmatprep.subr.mxu0 0.0
        %465 = vmatpush1.msra.mxu0 %v432
        %466 = vmatprep.subr.mxu0 0.0
        %467 = vmatpush2.msra.mxu0 0.0
        %468 = vmatprep.subr.mxu0 0.0
        %469 = vmatpush2.msra.mxu0 0.0
        %470 = vmatprep.subr.mxu0 0.0
        %471 = vmatpush2.msra.mxu0 0.0
        %472 = vmatprep.subr.mxu0 0.0
        %473 = vmatpush2.msra.mxu0 0.0
        %474 = vmatprep.subr.mxu0 0.0
        %475 = vmatpush2.msra.mxu0 0.0
        %476 = vmatprep.subr.mxu0 0.0
        %477 = vmatpush2.msra.mxu0 0.0
        %478 = vmatprep.subr.mxu0 0.0
        %479 = vmatpush2.msra.mxu0 0.0
        %480 = vmatprep.subr.mxu0 0.0
        %481 = vmatpush2.msra.mxu0 0.0
        %482 = vmatprep.subr.mxu0 0.0
        %483 = vmatpush2.msra.mxu0 0.0
        %484 = vmatprep.subr.mxu0 0.0
        %485 = vmatpush2.msra.mxu0 0.0
        %486 = vmatprep.subr.mxu0 0.0
        %487 = vmatpush2.msra.mxu0 0.0
        %488 = vmatprep.subr.mxu0 0.0
        %489 = vmatpush2.msra.mxu0 0.0
        %490 = vmatprep.subr.mxu0 0.0
        %491 = vmatpush2.msra.mxu0 0.0
        %492 = vmatprep.subr.mxu0 0.0
        %493 = vmatpush2.msra.mxu0 0.0
        %494 = vmatprep.subr.mxu0 0.0
        %495 = vmatpush2.msra.mxu0 0.0
        %496 = vmatprep.subr.mxu0 0.0
        %497 = vmatpush2.msra.mxu0 0.0
        %498 = vmatprep.mubr.f32.mxu0 0.0
        %499 = vmatmul.mubr.f32.gmra.mxu0 %v428
        %v500 = vpop.f32.mrf.mxu0
        %v501 = vadd.f32 0.0, %v500
        %v502 = vpop.f32.mrf.mxu0
        %503 = vdwg.mxu0
        %v504 = vadd.f32 %v413, %v501
        %v505 = vsub.f32 %v504, %v414
        %v506 = vmul.f32 %v505, %v505
        %vm507 = vcmask 261120
        %v508 = vsel %vm507, %v506, 0.0
        %509 = vadd.xlane.f32.xlu0 %v508
        %v510 = vpop.xlane.xlu0 %509
        %v511 = vrsqrt.pop %v510
        %v512 = vmul.f32 %v510, %v511
        %vm513 = vcmp.eq.f32.partialorder %v510, inf
        %v514 = vsel %vm513, %v510, %v512
        %vm515 = vcmp.eq.f32.partialorder %v510, 0.0
        %v516 = vand.u32 %v510, 2147483648
        %v517 = vsel %vm515, %v516, %v514
        %v518 = vmul.f32 %v416, %v517
        %v519 = vsub.f32 0.0, %v517
        %v520 = vmul.f32 %v519, 1.442695
        %v521 = vpow.pop %v520
        %v522 = vadd.f32 %v521, 1.0
        %v523 = vlog2.pop %v522
        %v524 = vmul.f32 %v523, 0.6931472
        %v525 = vmul.f32 -0.5, %v521
        %v526 = vadd.f32 %v525, 1.0
        %v527 = vmul.f32 %v526, %v521
        %v528 = vand.u32 2147483647, %v521
        %vm529 = vcmp.lt.f32.partialorder %v528, 0.0004427343
        %v530 = vsel %vm529, %v527, %v524
        %v531 = vadd.f32 %v518, %v530
        %s532 = smul.u32 %s24, 2
        %s533 = sadd.s32 %s532, %s25
        %s534 = smul.u32 %s533, 8
        %v535 = vlaneseq
        %v536 = vshrl.u32 %v535, 7
        %v537 = vstv %s534
        %v538 = vadd.s32 %v537, %v536
        %vm539 = vcmp.lt.s32.totalorder %v538, 20
        %v540 = vsel %vm539, %v531, 0.0
        %vm541 = vcmask 7168
        %v542 = vsel %vm541, %v540, 0.0
        %v543 = vrot.slane %v542, 4
        %v544 = vadd.f32 %v542, %v543
        %v545 = vrot.slane %v544, 2
        %v546 = vadd.f32 %v544, %v545
        %v547 = vrot.slane %v546, 1
        %v548 = vadd.f32 %v546, %v547
        %v549 = vld [vmem:[%s359] sm:$0xff]
        %551 = vset.pattern.permute.xlu0 0
        %552 = vperm.xlu0 %551, %v548
        %v553 = vpop.permute.xlu0 %552
        %v555 = vadd.f32 %v549, %v553
        %556 = vst [vmem:[%s359] sm:$0xff] %v555
        %s557 = sand.u32 %s197, 1
        %s558 = scalar_lea.sflag [#allocation4], %s557
        %s559 = sand.u32 %s197, 1
        %s560 = smul.addr %s559, 8
        %s561 = scalar_lea.vmem [#allocation5], %s560
        // Predicated region
        $region49: #{tpu_custom_call.1} parent=39 // pred_check
          %p562 = pneg %p207
        $region50: #{tpu_custom_call.1} parent=39 // pred_check_branch
          %564 = sbr.rel (%p562) target = $region52
        $region51: #{tpu_custom_call.1} parent=39 // pred_region
          %s566 = ssub.s32 128, 128
          %567 = vsyncadd %s558, %s566
          %s568 = smul.addr %s24, 128
          %s569 = scalar_lea.hbm %s5, %s568
          %s571 = sshll.u32 %s561, 4
          %s572 = int_to_ptr.vmem [resolvable:$true] %s571
          %574 = dma.vmem_to_hbm [thread:$0]  %s572, 128, %s569, %s558
        $region52: #{tpu_custom_call.1} parent=39 // pred_fallthru
          _
      $region40: #{tpu_custom_call.1} parent=5 // pred_fallthru
        _
      %p575 = scmp.le.s32.totalorder 2, %s15
      // Predicated region
      $region53: #{tpu_custom_call.1} parent=5 // pred_check
        %p576 = pneg %p575
      $region54: #{tpu_custom_call.1} parent=5 // pred_check_branch
        %578 = sbr.rel (%p576) target = $region56
      $region55: #{tpu_custom_call.1} parent=5 // pred_region
        %s579 = ssub.s32 %s15, 2
        // Predicated region
        $region57: #{tpu_custom_call.1} parent=55 // pred_check
          %p580 = pneg %p213
        $region58: #{tpu_custom_call.1} parent=55 // pred_check_branch
          %582 = sbr.rel (%p580) target = $region60
        $region59: #{tpu_custom_call.1} parent=55 // pred_region
          %s583 = sand.u32 %s198, 1
          %s584 = scalar_lea.sflag [#allocation4], %s583
          %s585 = sand.u32 %s198, 1
          %s586 = smul.addr %s585, 8
          %s587 = scalar_lea.vmem [#allocation5], %s586
          %588 = dma.done %s584, 128
        $region60: #{tpu_custom_call.1} parent=55 // pred_fallthru
          _
      $region56: #{tpu_custom_call.1} parent=5 // pred_fallthru
        _
    $region6: #{tpu_custom_call.1} parent=1 // loop_footer
      %s19 = sadd.s32 1, %s15
    $region7: #{tpu_custom_call.1} parent=1 // loop_footer_branch
      %14 = sbr.rel target = $region3
    $region8: #{tpu_custom_call.1} parent=1 // loop_exit
      _
    %589 = vsyncpa [#allocation3], 1
    %s590 = scalar_lea.sflag [#allocation3], 1
    %591 = vsyncpa %s590, 1
    %592 = vsyncpa [#allocation4], 1
    %s593 = scalar_lea.sflag [#allocation4], 1
    %594 = vsyncpa %s593, 1

</llo_original>
